<compile_context>
chip_gen: v7x
topology: tpu7x:2x2x1
jax: 0.10.0
libtpu: 0.0.40
codegen_flags: <defaults>
</compile_context>

<pallas_src>
import functools

import jax
import jax.numpy as jnp
from jax.experimental import pallas as pl
from jax.experimental.pallas import tpu as pltpu

_NEG_LARGE = jnp.float32(-1e30)  # finite "-inf" (avoids inf-inf NaN hazards)
_LANE = 128
_SUBLANE = 8


def _round_up(n, m):
    return ((n + m - 1) // m) * m


def actor_forward_kernel(x_ref, w1_ref, b1_ref, w2_ref, b2_ref, w3_ref, b3_ref,
                         out_ref, *, n_actions):
    """One batch tile: 2x(Linear+ReLU) + Linear + log-softmax, fully fused."""
    cdt = w1_ref.dtype  # matmul-operand dtype (bf16); accumulation is always f32
    x = x_ref[...].astype(cdt)  # no-op if the producer already emits bf16 state

    # hidden layer 1: Linear + ReLU (bias add / ReLU in f32)
    h1 = jnp.dot(x, w1_ref[...], preferred_element_type=jnp.float32) + b1_ref[...]
    h1 = jnp.maximum(h1, 0.0)

    # hidden layer 2: Linear + ReLU
    h2 = jnp.dot(h1.astype(cdt), w2_ref[...], preferred_element_type=jnp.float32) + b2_ref[...]
    h2 = jnp.maximum(h2, 0.0)

    # output layer: w3 is lane-padded to 128 cols with zeros and b3's padded entries are
    # -1e30 (set in the wrapper), so padded logits arrive pre-masked — no iota/where here.
    z = jnp.dot(h2.astype(cdt), w3_ref[...], preferred_element_type=jnp.float32) + b3_ref[...]

    # Categorical(logits=z).logits == z - logsumexp(z, -1, keepdims=True)  (max-shifted).
    # Reductions run on the full 128-lane padded width (exp(-1e30 - m) == 0 exactly).
    m = jnp.max(z, axis=-1, keepdims=True)
    zs = z - m
    lse = jnp.log(jnp.sum(jnp.exp(zs), axis=-1, keepdims=True))

    # Store only the valid n_actions lanes — the padded slab never touches HBM.
    out_ref[...] = (zs[:, :n_actions] - lse).astype(out_ref.dtype)


def actor_forward(state, params, *, compute_dtype=jnp.bfloat16, out_dtype=jnp.float32,
                  block_b=4096):
    """state: (B, D) f32 or bf16; params: dict w1,b1,w2,b2,w3,b3.

    Returns normalized logits (B, A) in `out_dtype` (f32 by default; bf16 halves the
    output HBM stream if the downstream sampler tolerates it)."""
    w1, b1 = params["w1"], params["b1"]
    w2, b2 = params["w2"], params["b2"]
    w3, b3 = params["w3"], params["b3"]
    B, D = state.shape
    A = w3.shape[1]
    H1, H2 = w1.shape[1], w2.shape[1]

    # In-kernel lane-dense padding of the action dim: pad w3 columns with zeros and b3
    # entries with -1e30 so padded logits are already masked (no per-step iota/where).
    a_pad = max(_LANE, _round_up(A, _LANE))
    w3p = w3
    b3p = b3.astype(jnp.float32)
    if a_pad != A:
        w3p = jnp.zeros((w3.shape[0], a_pad), w3.dtype).at[:, :A].set(w3)
        b3p = jnp.full((a_pad,), _NEG_LARGE, jnp.float32).at[:A].set(b3.astype(jnp.float32))

    # Matmul operands in bf16 (halved weight DMA, bf16 MXU rate); biases stay f32 (1, H).
    w1c = w1.astype(compute_dtype)
    w2c = w2.astype(compute_dtype)
    w3c = w3p.astype(compute_dtype)
    b1c = b1.reshape(1, -1).astype(jnp.float32)
    b2c = b2.reshape(1, -1).astype(jnp.float32)
    b3c = b3p.reshape(1, -1)

    # Batch tile: large to amortize the ~0.35 us/step grid overhead and get big DMAs,
    # but capped at ceil(B/2) (rounded to a sublane multiple) so the grid has >=2 steps
    # whenever possible — the "parallel" axis can then shard across v7x's two TCs.
    tb = min(block_b, max(_SUBLANE, _round_up(pl.cdiv(B, 2), _SUBLANE)))
    tb = min(tb, _round_up(B, _SUBLANE))
    grid = (pl.cdiv(B, tb),)

    x_spec = pl.BlockSpec((tb, D), lambda i: (i, 0))
    out_spec = pl.BlockSpec((tb, A), lambda i: (i, 0))  # only valid lanes hit HBM

    def resident(shape):
        nd = len(shape)
        # Constant block index => stays resident in VMEM across grid steps (no re-DMA).
        return pl.BlockSpec(shape, lambda i, _nd=nd: (0,) * _nd)

    itemsize = lambda a: a.size * a.dtype.itemsize
    cost = pl.CostEstimate(
        flops=2 * B * (D * H1 + H1 * H2 + H2 * a_pad),
        transcendentals=B * (a_pad + 1),
        bytes_accessed=(itemsize(state)
                        + B * A * jnp.dtype(out_dtype).itemsize
                        + sum(itemsize(a) for a in (w1c, b1c, w2c, b2c, w3c, b3c))),
    )

    return pl.pallas_call(
        functools.partial(actor_forward_kernel, n_actions=A),
        out_shape=jax.ShapeDtypeStruct((B, A), out_dtype),
        grid=grid,
        in_specs=[x_spec,
                  resident(w1c.shape), resident(b1c.shape),
                  resident(w2c.shape), resident(b2c.shape),
                  resident(w3c.shape), resident(b3c.shape)],
        out_specs=out_spec,
        compiler_params=pltpu.CompilerParams(
            dimension_semantics=("parallel",),
            vmem_limit_bytes=32 * 1024 * 1024),  # v5e default is 16 MiB; lift for big tiles
        cost_estimate=cost,
    )(state, w1c, b1c, w2c, b2c, w3c, b3c)


def actor_forward_ref(state, params, compute_dtype=jnp.bfloat16):
    """Pure-JAX reference using the same bf16-operand / f32-accumulate path."""
    w1 = params["w1"].astype(compute_dtype)
    w2 = params["w2"].astype(compute_dtype)
    w3 = params["w3"].astype(compute_dtype)
    h1 = jnp.maximum(jnp.dot(state.astype(compute_dtype), w1,
                             preferred_element_type=jnp.float32) + params["b1"], 0.0)
    h2 = jnp.maximum(jnp.dot(h1.astype(compute_dtype), w2,
                             preferred_element_type=jnp.float32) + params["b2"], 0.0)
    z = jnp.dot(h2.astype(compute_dtype), w3,
                preferred_element_type=jnp.float32) + params["b3"]
    return jax.nn.log_softmax(z, axis=-1)


def init_params(key, input_dim, hidden_layers, n_actions):
    """Deterministic synthetic init (uniform fan-in scaling like torch.nn.Linear)."""
    dims = [input_dim] + list(hidden_layers) + [n_actions]
    params = {}
    for i in range(len(dims) - 1):
        key, wk = jax.random.split(key)
        bound = 1.0 / jnp.sqrt(dims[i])
        w = jax.random.uniform(wk, (dims[i], dims[i + 1]), jnp.float32, -bound, bound)
        params[f"w{i + 1}"] = w
        params[f"b{i + 1}"] = jnp.zeros((dims[i + 1],), jnp.float32)
    # Actor.__init__ explicitly zeroes the last bias; already zero here.
    return params


if __name__ == "__main__":
    # TODO(synk): FFModel conv path (convs != []) and LayerNorm (ln=True) not exercised;
    # this implements the flat-state MLP configuration of Actor.forward.
    B, D = 8, 32          # batch, state dim
    hidden = [64, 64]     # hidden layers
    A = 16                # n_actions

    key = jax.random.PRNGKey(0)
    key, sk = jax.random.split(key)
    state = jax.random.normal(sk, (B, D), jnp.float32)
    params = init_params(key, D, hidden, A)

    logits = actor_forward(state, params)
    logits = jax.block_until_ready(logits)

    # sanity 1: normalized logits must exponentiate to a probability distribution
    probs_sum = jnp.sum(jnp.exp(logits), axis=-1)
    assert logits.shape == (B, A)
    assert bool(jnp.all(jnp.abs(probs_sum - 1.0) < 1e-4))

    # sanity 2: match the pure-JAX reference (same bf16-operand / f32-accumulate math)
    ref = actor_forward_ref(state, params)
    assert bool(jnp.all(jnp.abs(logits - ref) < 1e-3))

    print("KERNEL_OK")
</pallas_src>

<mosaic_0001>
module attributes {stable_mosaic.version = 11 : i64} {
  func.func @actor_forward_kernel(%arg0: i32, %arg1: memref<8x32xf32, #tpu.memory_space<vmem>>, %arg2: memref<32x64xbf16, #tpu.memory_space<vmem>>, %arg3: memref<1x64xf32, #tpu.memory_space<vmem>>, %arg4: memref<64x64xbf16, #tpu.memory_space<vmem>>, %arg5: memref<1x64xf32, #tpu.memory_space<vmem>>, %arg6: memref<64x128xbf16, #tpu.memory_space<vmem>>, %arg7: memref<1x128xf32, #tpu.memory_space<vmem>>, %arg8: memref<8x16xf32, #tpu.memory_space<vmem>>) attributes {dimension_semantics = [#tpu.dimension_semantics<parallel>], iteration_bounds = array<i64: 1>, scalar_prefetch = 0 : i64, scratch_operands = 0 : i64, tpu.core_type = #tpu.core_type<tc>, window_params = [{transform_indices = @transform_0, window_bounds = array<i64: 8, 32>}, {pipeline_mode = #tpu.pipeline_mode<synchronous>, transform_indices = @transform_1, window_bounds = array<i64: 32, 64>}, {pipeline_mode = #tpu.pipeline_mode<synchronous>, transform_indices = @transform_2, window_bounds = array<i64: 1, 64>}, {pipeline_mode = #tpu.pipeline_mode<synchronous>, transform_indices = @transform_3, window_bounds = array<i64: 64, 64>}, {pipeline_mode = #tpu.pipeline_mode<synchronous>, transform_indices = @transform_4, window_bounds = array<i64: 1, 64>}, {pipeline_mode = #tpu.pipeline_mode<synchronous>, transform_indices = @transform_5, window_bounds = array<i64: 64, 128>}, {pipeline_mode = #tpu.pipeline_mode<synchronous>, transform_indices = @transform_6, window_bounds = array<i64: 1, 128>}, {transform_indices = @transform_7, window_bounds = array<i64: 8, 16>}]} {
    %c0 = arith.constant 0 : index
    %c0_0 = arith.constant 0 : index
    %0 = vector.load %arg1[%c0, %c0_0] : memref<8x32xf32, #tpu.memory_space<vmem>>, vector<8x32xf32>
    %1 = arith.truncf %0 : vector<8x32xf32> to vector<8x32xbf16>
    %c0_1 = arith.constant 0 : index
    %c0_2 = arith.constant 0 : index
    %2 = vector.load %arg2[%c0_1, %c0_2] : memref<32x64xbf16, #tpu.memory_space<vmem>>, vector<32x64xbf16>
    %cst = arith.constant dense<0.000000e+00> : vector<8x64xf32>
    %3 = tpu.matmul %1, %2, %cst {dimension_numbers = #tpu.dot_dimension_numbers<[1], [0], [0], [1], [0, 0, 1, 1], [], []>} : vector<8x32xbf16>, vector<32x64xbf16>, vector<8x64xf32> -> vector<8x64xf32>
    %c0_3 = arith.constant 0 : index
    %c0_4 = arith.constant 0 : index
    %4 = vector.load %arg3[%c0_3, %c0_4] : memref<1x64xf32, #tpu.memory_space<vmem>>, vector<1x64xf32>
    %5 = vector.broadcast %4 : vector<1x64xf32> to vector<8x64xf32>
    %6 = arith.addf %3, %5 : vector<8x64xf32>
    %cst_5 = arith.constant 0.000000e+00 : f32
    %7 = vector.broadcast %cst_5 : f32 to vector<8x64xf32>
    %8 = arith.maximumf %6, %7 : vector<8x64xf32>
    %9 = arith.truncf %8 : vector<8x64xf32> to vector<8x64xbf16>
    %c0_6 = arith.constant 0 : index
    %c0_7 = arith.constant 0 : index
    %10 = vector.load %arg4[%c0_6, %c0_7] : memref<64x64xbf16, #tpu.memory_space<vmem>>, vector<64x64xbf16>
    %cst_8 = arith.constant dense<0.000000e+00> : vector<8x64xf32>
    %11 = tpu.matmul %9, %10, %cst_8 {dimension_numbers = #tpu.dot_dimension_numbers<[1], [0], [0], [1], [0, 0, 1, 1], [], []>} : vector<8x64xbf16>, vector<64x64xbf16>, vector<8x64xf32> -> vector<8x64xf32>
    %c0_9 = arith.constant 0 : index
    %c0_10 = arith.constant 0 : index
    %12 = vector.load %arg5[%c0_9, %c0_10] : memref<1x64xf32, #tpu.memory_space<vmem>>, vector<1x64xf32>
    %13 = vector.broadcast %12 : vector<1x64xf32> to vector<8x64xf32>
    %14 = arith.addf %11, %13 : vector<8x64xf32>
    %cst_11 = arith.constant 0.000000e+00 : f32
    %15 = vector.broadcast %cst_11 : f32 to vector<8x64xf32>
    %16 = arith.maximumf %14, %15 : vector<8x64xf32>
    %17 = arith.truncf %16 : vector<8x64xf32> to vector<8x64xbf16>
    %c0_12 = arith.constant 0 : index
    %c0_13 = arith.constant 0 : index
    %18 = vector.load %arg6[%c0_12, %c0_13] : memref<64x128xbf16, #tpu.memory_space<vmem>>, vector<64x128xbf16>
    %cst_14 = arith.constant dense<0.000000e+00> : vector<8x128xf32>
    %19 = tpu.matmul %17, %18, %cst_14 {dimension_numbers = #tpu.dot_dimension_numbers<[1], [0], [0], [1], [0, 0, 1, 1], [], []>} : vector<8x64xbf16>, vector<64x128xbf16>, vector<8x128xf32> -> vector<8x128xf32>
    %c0_15 = arith.constant 0 : index
    %c0_16 = arith.constant 0 : index
    %20 = vector.load %arg7[%c0_15, %c0_16] : memref<1x128xf32, #tpu.memory_space<vmem>>, vector<1x128xf32>
    %21 = vector.broadcast %20 : vector<1x128xf32> to vector<8x128xf32>
    %22 = arith.addf %19, %21 : vector<8x128xf32>
    %cst_17 = arith.constant dense<0xFF800000> : vector<8xf32>
    %23 = vector.multi_reduction <maximumf>, %22, %cst_17 [1] : vector<8x128xf32> to vector<8xf32>
    %24 = vector.shape_cast %23 : vector<8xf32> to vector<8x1xf32>
    %25 = vector.broadcast %24 : vector<8x1xf32> to vector<8x128xf32>
    %26 = arith.subf %22, %25 : vector<8x128xf32>
    %27 = math.exp %26 : vector<8x128xf32>
    %cst_18 = arith.constant dense<0.000000e+00> : vector<8xf32>
    %28 = vector.multi_reduction <add>, %27, %cst_18 [1] : vector<8x128xf32> to vector<8xf32>
    %29 = vector.shape_cast %28 : vector<8xf32> to vector<8x1xf32>
    %30 = math.log %29 : vector<8x1xf32>
    %31 = vector.extract_strided_slice %26 {offsets = [0, 0], sizes = [8, 16], strides = [1, 1]} : vector<8x128xf32> to vector<8x16xf32>
    %32 = vector.broadcast %30 : vector<8x1xf32> to vector<8x16xf32>
    %33 = arith.subf %31, %32 : vector<8x16xf32>
    %c0_19 = arith.constant 0 : index
    %c0_20 = arith.constant 0 : index
    %34 = vector.load %arg8[%c0_19, %c0_20] : memref<8x16xf32, #tpu.memory_space<vmem>>, vector<8x16xf32>
    tpu.vector_store %arg8[%c0_19, %c0_20], %33 {strides = array<i32>} : memref<8x16xf32, #tpu.memory_space<vmem>>, vector<8x16xf32>,
    return
  }
  func.func @transform_0(%arg0: i32) -> (i32, i32) {
    %c0_i32 = arith.constant 0 : i32
    %c0_i32_0 = arith.constant 0 : i32
    return %arg0, %c0_i32 : i32, i32
  }
  func.func @transform_1(%arg0: i32) -> (i32, i32) {
    %c0_i32 = arith.constant 0 : i32
    %c0_i32_0 = arith.constant 0 : i32
    %c0_i32_1 = arith.constant 0 : i32
    return %c0_i32, %c0_i32_0 : i32, i32
  }
  func.func @transform_2(%arg0: i32) -> (i32, i32) {
    %c0_i32 = arith.constant 0 : i32
    %c0_i32_0 = arith.constant 0 : i32
    %c0_i32_1 = arith.constant 0 : i32
    return %c0_i32, %c0_i32_0 : i32, i32
  }
  func.func @transform_3(%arg0: i32) -> (i32, i32) {
    %c0_i32 = arith.constant 0 : i32
    %c0_i32_0 = arith.constant 0 : i32
    %c0_i32_1 = arith.constant 0 : i32
    return %c0_i32, %c0_i32_0 : i32, i32
  }
  func.func @transform_4(%arg0: i32) -> (i32, i32) {
    %c0_i32 = arith.constant 0 : i32
    %c0_i32_0 = arith.constant 0 : i32
    %c0_i32_1 = arith.constant 0 : i32
    return %c0_i32, %c0_i32_0 : i32, i32
  }
  func.func @transform_5(%arg0: i32) -> (i32, i32) {
    %c0_i32 = arith.constant 0 : i32
    %c0_i32_0 = arith.constant 0 : i32
    %c0_i32_1 = arith.constant 0 : i32
    return %c0_i32, %c0_i32_0 : i32, i32
  }
  func.func @transform_6(%arg0: i32) -> (i32, i32) {
    %c0_i32 = arith.constant 0 : i32
    %c0_i32_0 = arith.constant 0 : i32
    %c0_i32_1 = arith.constant 0 : i32
    return %c0_i32, %c0_i32_0 : i32, i32
  }
  func.func @transform_7(%arg0: i32) -> (i32, i32) {
    %c0_i32 = arith.constant 0 : i32
    %c0_i32_0 = arith.constant 0 : i32
    return %arg0, %c0_i32 : i32, i32
  }
}

</mosaic_0001>

<llo_original>
// kernel: tpu_custom_call.1
$region0: #{tpu_custom_call.1}
  #allocation0 [shape = 'u32[]', space=smem, size = 0x4, offset = 0x4, fixed_abs, tag = 'smem constant byte address 0x4 - core index']
  #allocation1 [shape = 'u32[144,128]{1,0:T(1,128)}', space=vmem, size = 0x12000, scoped, tag = 'internal scratch']
  %s0 = inlined_call_operand.hbm [shape: f32[8,32], index: 0, kind: input, shape index: {}]
  %s1 = inlined_call_operand.hbm [shape: bf16[32,64], index: 1, kind: input, shape index: {}]
  %s2 = inlined_call_operand.vmem [shape: f32[1,64], index: 2, kind: input, shape index: {}]
  %s3 = inlined_call_operand.hbm [shape: bf16[64,64], index: 3, kind: input, shape index: {}]
  %s4 = inlined_call_operand.vmem [shape: f32[1,64], index: 4, kind: input, shape index: {}]
  %s5 = inlined_call_operand.hbm [shape: bf16[64,128], index: 5, kind: input, shape index: {}]
  %s6 = inlined_call_operand.vmem [shape: f32[1,128], index: 6, kind: input, shape index: {}]
  %s7 = inlined_call_operand.hbm [shape: f32[8,16], index: 7, kind: output, shape index: {}]
  %s8 = sld [smem:[#allocation0]]
  $region54: #{tpu_custom_call.1} parent=0
    _
  %s10 = ssub.s32 1, %s8
  %s11 = scalar_select 0, %s10, %s8
  $region1: #{tpu_custom_call.1} parent=0
    #allocation2 [shape = 'u8[4096]{0}', space=vmem, size = 0x1000, scoped, tag = 'input window, operand 0, single buffered']
    #allocation3 [shape = 's32[1]{0}', space=sflag, size = 0x4, scoped, tag = 'scoped memory for tpu_custom_call.1']
    #allocation4 [shape = 's32[1]{0}', space=sflag, size = 0x4, scoped, tag = 'scoped memory for tpu_custom_call.1']
    #allocation5 [shape = 'u8[8192]{0}', space=vmem, size = 0x2000, scoped, tag = 'input window, operand 1, single buffered']
    #allocation6 [shape = 's32[1]{0}', space=sflag, size = 0x4, scoped, tag = 'scoped memory for tpu_custom_call.1']
    #allocation7 [shape = 'u8[16384]{0}', space=vmem, size = 0x4000, scoped, tag = 'input window, operand 3, single buffered']
    #allocation8 [shape = 'u8[16384]{0}', space=vmem, size = 0x4000, scoped, tag = 'input window, operand 5, single buffered']
    #allocation9 [shape = 's32[1]{0}', space=sflag, size = 0x4, scoped, tag = 'scoped memory for tpu_custom_call.1']
    #allocation10 [shape = 'u8[4096]{0}', space=vmem, size = 0x1000, scoped, tag = 'output window, operand 0, single buffered']
    %12 = vsyncpa [#allocation3], 0
    %13 = vsyncpa [#allocation6], 0
    %14 = vsyncpa [#allocation9], 0
    %15 = vsyncpa [#allocation4], 0
    // Predicated region
    $region2: #{tpu_custom_call.1} parent=1 // pred_check
      _
    $region3: #{tpu_custom_call.1} parent=1 // pred_check_branch
      %17 = sbr.rel (0) target = $region5
    $region4: #{tpu_custom_call.1} parent=1 // pred_region
      %s19 = ssub.s32 128, 128
      %20 = vsyncadd [#allocation3], %s19
      %s22 = sshll.u32 [#allocation2], 4
      %s23 = int_to_ptr.vmem [resolvable:$true] %s22
      %25 = dma.hbm_to_vmem [thread:$0]  %s0, 128, %s23, [#allocation3]
    $region5: #{tpu_custom_call.1} parent=1 // pred_fallthru
      _
    // Predicated region
    $region6: #{tpu_custom_call.1} parent=1 // pred_check
      _
    $region7: #{tpu_custom_call.1} parent=1 // pred_check_branch
      %27 = sbr.rel (0) target = $region9
    $region8: #{tpu_custom_call.1} parent=1 // pred_region
      %s29 = ssub.s32 256, 256
      %30 = vsyncadd [#allocation6], %s29
      %s31 = sshll.u32 [#allocation5], 4
      %s32 = int_to_ptr.vmem [resolvable:$true] %s31
      %37 = dma.hbm_to_vmem [thread:$0]  %s1, 256, %s32, [#allocation6], 64, 64, 4
    $region9: #{tpu_custom_call.1} parent=1 // pred_fallthru
      _
    // Predicated region
    $region10: #{tpu_custom_call.1} parent=1 // pred_check
      _
    $region11: #{tpu_custom_call.1} parent=1 // pred_check_branch
      %39 = sbr.rel (0) target = $region13
    $region12: #{tpu_custom_call.1} parent=1 // pred_region
      _
    $region13: #{tpu_custom_call.1} parent=1 // pred_fallthru
      _
    // Predicated region
    $region14: #{tpu_custom_call.1} parent=1 // pred_check
      _
    $region15: #{tpu_custom_call.1} parent=1 // pred_check_branch
      %41 = sbr.rel (0) target = $region17
    $region16: #{tpu_custom_call.1} parent=1 // pred_region
      %s43 = ssub.s32 512, 512
      %44 = vsyncadd [#allocation6], %s43
      %s45 = sshll.u32 [#allocation7], 4
      %s46 = int_to_ptr.vmem [resolvable:$true] %s45
      %51 = dma.hbm_to_vmem [thread:$0]  %s3, 512, %s46, [#allocation6], 64, 64, 4
    $region17: #{tpu_custom_call.1} parent=1 // pred_fallthru
      _
    // Predicated region
    $region18: #{tpu_custom_call.1} parent=1 // pred_check
      _
    $region19: #{tpu_custom_call.1} parent=1 // pred_check_branch
      %53 = sbr.rel (0) target = $region21
    $region20: #{tpu_custom_call.1} parent=1 // pred_region
      _
    $region21: #{tpu_custom_call.1} parent=1 // pred_fallthru
      _
    // Predicated region
    $region22: #{tpu_custom_call.1} parent=1 // pred_check
      _
    $region23: #{tpu_custom_call.1} parent=1 // pred_check_branch
      %55 = sbr.rel (0) target = $region25
    $region24: #{tpu_custom_call.1} parent=1 // pred_region
      %s57 = ssub.s32 512, 512
      %58 = vsyncadd [#allocation9], %s57
      %s59 = sshll.u32 [#allocation8], 4
      %s60 = int_to_ptr.vmem [resolvable:$true] %s59
      %65 = dma.hbm_to_vmem [thread:$0]  %s5, 512, %s60, [#allocation9], 64, 64, 4
    $region25: #{tpu_custom_call.1} parent=1 // pred_fallthru
      _
    // Predicated region
    $region26: #{tpu_custom_call.1} parent=1 // pred_check
      _
    $region27: #{tpu_custom_call.1} parent=1 // pred_check_branch
      %67 = sbr.rel (0) target = $region29
    $region28: #{tpu_custom_call.1} parent=1 // pred_region
      _
    $region29: #{tpu_custom_call.1} parent=1 // pred_fallthru
      _
    // Predicated region
    $region30: #{tpu_custom_call.1} parent=1 // pred_check
      _
    $region31: #{tpu_custom_call.1} parent=1 // pred_check_branch
      %69 = sbr.rel (0) target = $region33
    $region32: #{tpu_custom_call.1} parent=1 // pred_region
      %70 = dma.done [#allocation3], 128
    $region33: #{tpu_custom_call.1} parent=1 // pred_fallthru
      _
    // Predicated region
    $region34: #{tpu_custom_call.1} parent=1 // pred_check
      _
    $region35: #{tpu_custom_call.1} parent=1 // pred_check_branch
      %72 = sbr.rel (0) target = $region37
    $region36: #{tpu_custom_call.1} parent=1 // pred_region
      %73 = dma.done [#allocation6], 256
    $region37: #{tpu_custom_call.1} parent=1 // pred_fallthru
      _
    // Predicated region
    $region38: #{tpu_custom_call.1} parent=1 // pred_check
      _
    $region39: #{tpu_custom_call.1} parent=1 // pred_check_branch
      %75 = sbr.rel (0) target = $region41
    $region40: #{tpu_custom_call.1} parent=1 // pred_region
      %76 = dma.done [#allocation6], 512
    $region41: #{tpu_custom_call.1} parent=1 // pred_fallthru
      _
    // Predicated region
    $region42: #{tpu_custom_call.1} parent=1 // pred_check
      _
    $region43: #{tpu_custom_call.1} parent=1 // pred_check_branch
      %78 = sbr.rel (0) target = $region45
    $region44: #{tpu_custom_call.1} parent=1 // pred_region
      %79 = dma.done [#allocation9], 512
    $region45: #{tpu_custom_call.1} parent=1 // pred_fallthru
      _
    %v81 = vld [vmem:[#allocation2] sm:$0xff]
    %v82 = vpack.c.bf16 %v81, %v81
    %v83 = vld [vmem:[#allocation5] sm:$0xf]
    %v84 = vld [vmem:[#allocation5 + $0x4] sm:$0xf]
    %v85 = vld [vmem:[#allocation5 + $0x8] sm:$0xf]
    %v86 = vld [vmem:[#allocation5 + $0xc] sm:$0xf]
    %v87 = vld [vmem:[%s2] sm:$0x1]
    %v89 = vlaneseq
    %v90 = vshrl.u32 %v89, 7
    %v91 = vsub.s32 0, %v90
    %v92 = vrot.slane %v87, %v91
    %v98 = vunpack.c.l.b16 %v83
    %v99 = vunpack.c.l.b16 %v84
    %v100 = vunpack.c.l.b16 %v85
    %v101 = vunpack.c.l.b16 %v86
    %v102 = vpack.c.b16 %v99, %v98
    %v103 = vpack.c.b16 %v101, %v100
    %vm106 = vcmask 261120
    %v108 = vsel %vm106, %v82, 0
    %110 = vmatprep.subr.bf16.mxu0 0
    %111 = vmatpush1.bf16.msra.mxu0 %v102
    %112 = vmatprep.subr.bf16.mxu0 0
    %113 = vmatpush1.bf16.msra.mxu0 %v103
    %114 = vmatprep.subr.bf16.mxu0 0
    %115 = vmatpush1.bf16.msra.mxu0 0
    %116 = vmatprep.subr.bf16.mxu0 0
    %117 = vmatpush1.bf16.msra.mxu0 0
    %118 = vmatprep.subr.bf16.mxu0 0
    %119 = vmatpush1.bf16.msra.mxu0 0
    %120 = vmatprep.subr.bf16.mxu0 0
    %121 = vmatpush1.bf16.msra.mxu0 0
    %122 = vmatprep.subr.bf16.mxu0 0
    %123 = vmatpush1.bf16.msra.mxu0 0
    %124 = vmatprep.subr.bf16.mxu0 0
    %125 = vmatpush1.bf16.msra.mxu0 0
    %126 = vmatprep.subr.bf16.mxu0 0
    %127 = vmatpush1.bf16.msra.mxu0 0
    %128 = vmatprep.subr.bf16.mxu0 0
    %129 = vmatpush1.bf16.msra.mxu0 0
    %130 = vmatprep.subr.bf16.mxu0 0
    %131 = vmatpush1.bf16.msra.mxu0 0
    %132 = vmatprep.subr.bf16.mxu0 0
    %133 = vmatpush1.bf16.msra.mxu0 0
    %134 = vmatprep.subr.bf16.mxu0 0
    %135 = vmatpush1.bf16.msra.mxu0 0
    %136 = vmatprep.subr.bf16.mxu0 0
    %137 = vmatpush1.bf16.msra.mxu0 0
    %138 = vmatprep.subr.bf16.mxu0 0
    %139 = vmatpush1.bf16.msra.mxu0 0
    %140 = vmatprep.subr.bf16.mxu0 0
    %141 = vmatpush1.bf16.msra.mxu0 0
    %142 = vmatprep.mubr.bf16.mxu0 0
    %143 = vmatmul.mubr.bf16.gmra.mrb[0].mxu0 %v108
    %v144 = vpop.f32.mrb[0].mxu0
    %v145 = vadd.f32 %v92, %v144
    %v146 = vpop.f32.mrb[0].mxu0
    %v147 = vpop.f32.mrb[0].mxu0
    %v148 = vpop.f32.mrb[0].mxu0
    %149 = vdwg.mxu0
    %v150 = vmax.f32 %v145, 0.0
    %v151 = vpack.c.bf16 %v150, %v150
    %v152 = vld [vmem:[#allocation7] sm:$0xf]
    %v153 = vld [vmem:[#allocation7 + $0x4] sm:$0xf]
    %v154 = vld [vmem:[#allocation7 + $0x8] sm:$0xf]
    %v155 = vld [vmem:[#allocation7 + $0xc] sm:$0xf]
    %v156 = vld [vmem:[#allocation7 + $0x10] sm:$0xf]
    %v157 = vld [vmem:[#allocation7 + $0x14] sm:$0xf]
    %v158 = vld [vmem:[#allocation7 + $0x18] sm:$0xf]
    %v159 = vld [vmem:[#allocation7 + $0x1c] sm:$0xf]
    %v160 = vld [vmem:[%s4] sm:$0x1]
    %v162 = vlaneseq
    %v163 = vshrl.u32 %v162, 7
    %v164 = vsub.s32 0, %v163
    %v165 = vrot.slane %v160, %v164
    %v175 = vunpack.c.l.b16 %v152
    %v176 = vunpack.c.l.b16 %v153
    %v177 = vunpack.c.l.b16 %v154
    %v178 = vunpack.c.l.b16 %v155
    %v179 = vunpack.c.l.b16 %v156
    %v180 = vunpack.c.l.b16 %v157
    %v181 = vunpack.c.l.b16 %v158
    %v182 = vunpack.c.l.b16 %v159
    %v183 = vpack.c.b16 %v176, %v175
    %v184 = vpack.c.b16 %v178, %v177
    %v185 = vpack.c.b16 %v180, %v179
    %v186 = vpack.c.b16 %v182, %v181
    %vm191 = vcmask 523264
    %v193 = vsel %vm191, %v151, 0
    %195 = vmatprep.subr.bf16.mxu0 0
    %196 = vmatpush1.bf16.msra.mxu0 %v183
    %197 = vmatprep.subr.bf16.mxu0 0
    %198 = vmatpush1.bf16.msra.mxu0 %v184
    %199 = vmatprep.subr.bf16.mxu0 0
    %200 = vmatpush1.bf16.msra.mxu0 %v185
    %201 = vmatprep.subr.bf16.mxu0 0
    %202 = vmatpush1.bf16.msra.mxu0 %v186
    %203 = vmatprep.subr.bf16.mxu0 0
    %204 = vmatpush1.bf16.msra.mxu0 0
    %205 = vmatprep.subr.bf16.mxu0 0
    %206 = vmatpush1.bf16.msra.mxu0 0
    %207 = vmatprep.subr.bf16.mxu0 0
    %208 = vmatpush1.bf16.msra.mxu0 0
    %209 = vmatprep.subr.bf16.mxu0 0
    %210 = vmatpush1.bf16.msra.mxu0 0
    %211 = vmatprep.subr.bf16.mxu0 0
    %212 = vmatpush1.bf16.msra.mxu0 0
    %213 = vmatprep.subr.bf16.mxu0 0
    %214 = vmatpush1.bf16.msra.mxu0 0
    %215 = vmatprep.subr.bf16.mxu0 0
    %216 = vmatpush1.bf16.msra.mxu0 0
    %217 = vmatprep.subr.bf16.mxu0 0
    %218 = vmatpush1.bf16.msra.mxu0 0
    %219 = vmatprep.subr.bf16.mxu0 0
    %220 = vmatpush1.bf16.msra.mxu0 0
    %221 = vmatprep.subr.bf16.mxu0 0
    %222 = vmatpush1.bf16.msra.mxu0 0
    %223 = vmatprep.subr.bf16.mxu0 0
    %224 = vmatpush1.bf16.msra.mxu0 0
    %225 = vmatprep.subr.bf16.mxu0 0
    %226 = vmatpush1.bf16.msra.mxu0 0
    %227 = vmatprep.mubr.bf16.mxu0 0
    %228 = vmatmul.mubr.bf16.gmra.mrb[0].mxu0 %v193
    %v229 = vpop.f32.mrb[0].mxu0
    %v230 = vadd.f32 %v165, %v229
    %v231 = vpop.f32.mrb[0].mxu0
    %v232 = vpop.f32.mrb[0].mxu0
    %v233 = vpop.f32.mrb[0].mxu0
    %234 = vdwg.mxu0
    %v235 = vmax.f32 %v230, 0.0
    %v236 = vpack.c.bf16 %v235, %v235
    %v237 = vld [vmem:[#allocation8] sm:$0xf]
    %v238 = vld [vmem:[#allocation8 + $0x4] sm:$0xf]
    %v239 = vld [vmem:[#allocation8 + $0x8] sm:$0xf]
    %v240 = vld [vmem:[#allocation8 + $0xc] sm:$0xf]
    %v241 = vld [vmem:[#allocation8 + $0x10] sm:$0xf]
    %v242 = vld [vmem:[#allocation8 + $0x14] sm:$0xf]
    %v243 = vld [vmem:[#allocation8 + $0x18] sm:$0xf]
    %v244 = vld [vmem:[#allocation8 + $0x1c] sm:$0xf]
    %v245 = vld [vmem:[%s6] sm:$0x1]
    %v247 = vlaneseq
    %v248 = vshrl.u32 %v247, 7
    %v249 = vsub.s32 0, %v248
    %v250 = vrot.slane %v245, %v249
    %v260 = vunpack.c.l.b16 %v237
    %v261 = vunpack.c.l.b16 %v238
    %v262 = vunpack.c.l.b16 %v239
    %v263 = vunpack.c.l.b16 %v240
    %v264 = vunpack.c.l.b16 %v241
    %v265 = vunpack.c.l.b16 %v242
    %v266 = vunpack.c.l.b16 %v243
    %v267 = vunpack.c.l.b16 %v244
    %v268 = vpack.c.b16 %v261, %v260
    %v269 = vpack.c.b16 %v263, %v262
    %v270 = vpack.c.b16 %v265, %v264
    %v271 = vpack.c.b16 %v267, %v266
    %v277 = vsel %vm191, %v236, 0
    %279 = vmatprep.subr.bf16.mxu0 0
    %280 = vmatpush1.bf16.msra.mxu0 %v268
    %281 = vmatprep.subr.bf16.mxu0 0
    %282 = vmatpush1.bf16.msra.mxu0 %v269
    %283 = vmatprep.subr.bf16.mxu0 0
    %284 = vmatpush1.bf16.msra.mxu0 %v270
    %285 = vmatprep.subr.bf16.mxu0 0
    %286 = vmatpush1.bf16.msra.mxu0 %v271
    %287 = vmatprep.subr.bf16.mxu0 0
    %288 = vmatpush1.bf16.msra.mxu0 0
    %289 = vmatprep.subr.bf16.mxu0 0
    %290 = vmatpush1.bf16.msra.mxu0 0
    %291 = vmatprep.subr.bf16.mxu0 0
    %292 = vmatpush1.bf16.msra.mxu0 0
    %293 = vmatprep.subr.bf16.mxu0 0
    %294 = vmatpush1.bf16.msra.mxu0 0
    %295 = vmatprep.subr.bf16.mxu0 0
    %296 = vmatpush1.bf16.msra.mxu0 0
    %297 = vmatprep.subr.bf16.mxu0 0
    %298 = vmatpush1.bf16.msra.mxu0 0
    %299 = vmatprep.subr.bf16.mxu0 0
    %300 = vmatpush1.bf16.msra.mxu0 0
    %301 = vmatprep.subr.bf16.mxu0 0
    %302 = vmatpush1.bf16.msra.mxu0 0
    %303 = vmatprep.subr.bf16.mxu0 0
    %304 = vmatpush1.bf16.msra.mxu0 0
    %305 = vmatprep.subr.bf16.mxu0 0
    %306 = vmatpush1.bf16.msra.mxu0 0
    %307 = vmatprep.subr.bf16.mxu0 0
    %308 = vmatpush1.bf16.msra.mxu0 0
    %309 = vmatprep.subr.bf16.mxu0 0
    %310 = vmatpush1.bf16.msra.mxu0 0
    %311 = vmatprep.mubr.bf16.mxu0 0
    %312 = vmatmul.mubr.bf16.gmra.mrb[0].mxu0 %v277
    %v313 = vpop.f32.mrb[0].mxu0
    %v314 = vadd.f32 %v250, %v313
    %v315 = vpop.f32.mrb[0].mxu0
    %v316 = vpop.f32.mrb[0].mxu0
    %v317 = vpop.f32.mrb[0].mxu0
    %318 = vdwg.mxu0
    %319 = vmax.xlane.f32.xlu0 %v314
    %v320 = vpop.xlane.xlu0 %319
    %v321 = vsub.f32 %v314, %v320
    %v322 = vmul.f32 %v321, 1.442695
    %v323 = vpow.pop %v322
    %324 = vadd.xlane.f32.xlu0 %v323
    %v325 = vpop.xlane.xlu0 %324
    %v326 = vlog2.pop %v325
    %v327 = vmul.f32 %v326, 0.6931472
    %v328 = vsub.f32 %v321, %v327
    %vm329 = vcmask 130048
    %330 = vst.msk [vmem:[#allocation10] sm:$0xff] %vm329, %v328
    // Predicated region
    $region46: #{tpu_custom_call.1} parent=1 // pred_check
      _
    $region47: #{tpu_custom_call.1} parent=1 // pred_check_branch
      %332 = sbr.rel (0) target = $region49
    $region48: #{tpu_custom_call.1} parent=1 // pred_region
      %s334 = ssub.s32 128, 128
      %335 = vsyncadd [#allocation4], %s334
      %s337 = sshll.u32 [#allocation10], 4
      %s338 = int_to_ptr.vmem [resolvable:$true] %s337
      %340 = dma.vmem_to_hbm [thread:$0]  %s338, 128, %s7, [#allocation4]
    $region49: #{tpu_custom_call.1} parent=1 // pred_fallthru
      _
    // Predicated region
    $region50: #{tpu_custom_call.1} parent=1 // pred_check
      _
    $region51: #{tpu_custom_call.1} parent=1 // pred_check_branch
      %342 = sbr.rel (0) target = $region53
    $region52: #{tpu_custom_call.1} parent=1 // pred_region
      %343 = dma.done [#allocation4], 128
    $region53: #{tpu_custom_call.1} parent=1 // pred_fallthru
      _
    %344 = vsyncpa [#allocation3], 1
    %345 = vsyncpa [#allocation6], 1
    %346 = vsyncpa [#allocation9], 1
    %347 = vsyncpa [#allocation4], 1

</llo_original>
